<compile_context>
chip_gen: v7x
topology: tpu7x:2x2x1
jax: 0.10.0
libtpu: 0.0.40
codegen_flags: <defaults>
</compile_context>

<pallas_src>
import jax
import jax.numpy as jnp
from jax.experimental import pallas as pl
from jax.experimental.pallas import tpu as pltpu


def _vq_kernel(x_ref, w_ref, wsqh_ref, q_ref, idx_ref, sq_ref):
    """One grid step: a (C, THW) NCHW tile of inputs vs. the full codebook.

    scores = w @ x_tile on the MXU; dist = 0.5*||w||^2 - scores (the ||x||^2
    term is a per-column constant and the 0.5 scale cannot change the argmin);
    argmin over K with torch tie-breaking (lowest index) via a lane-broadcast
    (K, 1) iota; codebook gather via a transposed one-hot matmul yielding the
    quantized tile directly in (C, THW) = NCHW layout; per-position squared
    error from the distance identity ||q - x||^2 = ||x||^2 + 2*dmin_half.
    """
    xc = x_ref[0]                                    # (C, THW), native dtype
    w = w_ref[...]                                   # (K, C),  native dtype
    K = w.shape[0]

    # MXU: (K, C) @ (C, THW) -> (K, THW); accumulate in f32.
    scores = jnp.dot(w, xc, preferred_element_type=jnp.float32)
    dist = wsqh_ref[...].astype(jnp.float32) - scores            # (K, THW)

    # argmin over the codebook (sublane) axis, lowest index on ties
    # (torch.argmin semantics).  The iota is (K, 1) and broadcast along lanes
    # inside the compare/select -- never materialized at (K, THW).
    dmin = jnp.min(dist, axis=0, keepdims=True)                  # (1, THW)
    iota_k = jax.lax.broadcasted_iota(jnp.int32, (K, 1), 0).astype(jnp.float32)
    idx_f = jnp.min(jnp.where(dist == dmin, iota_k, float(K)),
                    axis=0, keepdims=True)                       # (1, THW)
    idx_ref[0, 0] = idx_f.astype(jnp.int32)                      # lane-dense row

    # Gather: w^T @ onehot = (C, K) @ (K, THW) -> (C, THW) on the MXU
    # (transposed LHS via dot_general dimension_numbers).
    onehot = (iota_k == idx_f).astype(w.dtype)                   # (K, THW)
    q = jax.lax.dot_general(w, onehot, (((0,), (0,)), ((), ())),
                            preferred_element_type=jnp.float32)  # (C, THW)
    q_ref[0] = q.astype(q_ref.dtype)

    # Per-position squared error via the distance identity:
    #   ||q - x||^2 = ||x||^2 + ||w_idx||^2 - 2 w_idx.x = ||x||^2 + 2*dmin_half
    xf = xc.astype(jnp.float32)
    xsq = jnp.sum(xf * xf, axis=0, keepdims=True)                # (1, THW)
    sq_ref[0, 0] = xsq + 2.0 * dmin


def _vmem_bytes_estimate(tile_hw, C, K, itemsize):
    """Per-core VMEM working set for one grid step (double-buffered blocks +
    live f32 intermediates)."""
    k_pad = ((K + 7) // 8) * 8
    blocks = 2 * (                                  # Pallas double-buffers all operands
        2 * C * tile_hw * itemsize                  # x + q blocks
        + 2 * tile_hw * 4                           # idx + sq lane-dense rows
        + K * C * itemsize                          # resident codebook
        + k_pad * 128 * 4)                          # lane-padded (K, 1) wsq block
    interm = (4 * K * tile_hw * 4                   # scores / dist / mask / one-hot
              + 2 * C * tile_hw * 4)                # f32 quantized tile + x^2 temporaries
    return int(blocks + interm)


def _vmem_budget():
    """(tile working-set budget, vmem_limit cap) for the current TPU generation."""
    try:
        cap = int(pltpu.get_tpu_info().vmem_capacity_bytes)
    except Exception:
        cap = 64 * 2**20                            # unknown: assume the smallest (v7x)
    if cap >= 96 * 2**20:                           # v5e / v6e: 128 MiB per TensorCore
        return 40 * 2**20, 96 * 2**20
    return 12 * 2**20, 44 * 2**20                   # v7x: 64 MiB, leave Mosaic headroom


def _choose_tiling(HW, C, K, itemsize, budget_bytes, cap=8192):
    """Pick (tile_hw, pad).  Preference: largest multiple-of-128 divisor of HW
    (or HW itself as a full-extent block) that fits the budget; otherwise the
    largest fitting multiple of 128 with HW padded up to a multiple of it."""
    def fits(t):
        return _vmem_bytes_estimate(t, C, K, itemsize) <= budget_bytes

    exact = [t for t in range(128, min(HW, cap) + 1, 128)
             if HW % t == 0 and fits(t)]
    if HW <= cap and fits(HW):
        exact.append(HW)                            # full-extent block is always legal
    if exact:
        return max(exact), 0

    mult = [t for t in range(128, cap + 1, 128) if fits(t)]
    t = max(mult) if mult else 128
    t = min(t, -(-HW // 128) * 128)                 # no point exceeding padded HW
    return t, (-HW) % t


def vector_quantizer_forward(x, embeddings, commitment_cost=0.25,
                             training=True, tile_hw=None):
    """Pallas-backed equivalent of VectorQuantizer.forward.

    x:          (B, C, H, W) with C == embedding_dim
    embeddings: (num_embeddings, embedding_dim)
    Returns (quantized, loss, indices) if training else (quantized, indices).
    """
    B, C, H, W = x.shape
    K, D = embeddings.shape
    if D != C:
        raise ValueError(f"embedding_dim {D} must equal channel count {C}")
    HW = H * W
    itemsize = jnp.dtype(x.dtype).itemsize

    budget, limit_cap = _vmem_budget()
    if tile_hw is None:
        tile_hw, pad = _choose_tiling(HW, C, K, itemsize, budget)
    else:
        if tile_hw == HW:
            pad = 0
        elif tile_hw % 128 == 0:
            pad = (-HW) % tile_hw
        else:
            raise ValueError(f"tile_hw={tile_hw} must be a multiple of 128 or "
                             f"equal H*W={HW}")
    HW_t = HW + pad
    n_hw = HW_t // tile_hw

    x3 = x.reshape(B, C, HW)                        # free reshape, stays NCHW
    if pad:
        x3 = jnp.pad(x3, ((0, 0), (0, 0), (0, pad)))

    # 0.5 * ||w||^2 hoisted out of the grid loop (computed once, tiny).
    w_sq_half = 0.5 * jnp.sum(embeddings.astype(jnp.float32) ** 2,
                              axis=1, keepdims=True)            # (K, 1)

    est = _vmem_bytes_estimate(tile_hw, C, K, itemsize)
    vmem_limit = int(min(limit_cap, max(32 * 2**20, 2 * est)))

    q3, idx4, sq4 = pl.pallas_call(
        _vq_kernel,
        out_shape=(
            jax.ShapeDtypeStruct((B, C, HW_t), x.dtype),                 # quantized (NCHW)
            jax.ShapeDtypeStruct((B, n_hw, 1, tile_hw), jnp.int32),      # indices (lane-dense)
            jax.ShapeDtypeStruct((B, n_hw, 1, tile_hw), jnp.float32),    # per-position (q-x)^2 sums over C
        ),
        grid_spec=pltpu.PrefetchScalarGridSpec(
            num_scalar_prefetch=0,
            grid=(B, n_hw),
            in_specs=[
                pl.BlockSpec((1, C, tile_hw), lambda b, t: (b, 0, t)),   # x tile (NCHW)
                pl.BlockSpec((K, C), lambda b, t: (0, 0)),   # codebook (constant idx -> DMA'd once per core)
                pl.BlockSpec((K, 1), lambda b, t: (0, 0)),   # 0.5*||w||^2 (constant idx)
            ],
            out_specs=[
                pl.BlockSpec((1, C, tile_hw), lambda b, t: (b, 0, t)),
                pl.BlockSpec((1, 1, 1, tile_hw), lambda b, t: (b, t, 0, 0)),
                pl.BlockSpec((1, 1, 1, tile_hw), lambda b, t: (b, t, 0, 0)),
            ],
        ),
        compiler_params=pltpu.CompilerParams(
            dimension_semantics=("parallel", "parallel"),
            vmem_limit_bytes=vmem_limit),
    )(x3, embeddings, w_sq_half)

    if pad:
        q3 = q3[:, :, :HW]
    quantized = q3.reshape(B, C, H, W)              # already NCHW

    idx2 = idx4.reshape(B, HW_t)
    if pad:
        idx2 = idx2[:, :HW]
    encoding_indices = idx2.reshape(-1)             # (B*H*W,), (b, h, w) order

    if not training:
        return quantized, encoding_indices

    sq2 = sq4.reshape(B, HW_t)
    if pad:
        sq2 = sq2[:, :HW]
    mse = jnp.sum(sq2) / jnp.float32(B * C * HW)
    # q_latent_loss = mse(quantized, x.detach()); e_latent_loss = mse(x, quantized.detach())
    # both equal `mse` numerically; only their gradients differ.
    loss = mse + commitment_cost * mse
    # straight-through estimator: forward value equals `quantized`.
    quantized = x + jax.lax.stop_gradient(quantized - x)
    return quantized, loss, encoding_indices


def _reference(x, embeddings, commitment_cost=0.25):
    """Pure-JAX mirror of VectorQuantizer.forward (training mode)."""
    B, C, H, W = x.shape
    z = jnp.transpose(x, (0, 2, 3, 1)).reshape(-1, C)
    scores = jnp.dot(z, embeddings.T, precision=jax.lax.Precision.HIGHEST)
    dist = jnp.sum(embeddings ** 2, axis=1)[None, :] - 2.0 * scores
    idx = jnp.argmin(dist, axis=1)
    q = embeddings[idx].reshape(B, H, W, C).transpose(0, 3, 1, 2)
    mse = jnp.mean((q - x) ** 2)
    loss = mse + commitment_cost * mse
    return q, loss, idx


if __name__ == "__main__":
    key = jax.random.PRNGKey(0)
    k_x, k_w = jax.random.split(key)

    # small shapes consistent with the module: embedding_dim == channels
    B, C, H, W = 2, 32, 16, 16        # embedding_dim = 32, H*W = 256
    num_embeddings = 64               # codebook size
    commitment_cost = 0.25

    x = jax.random.normal(k_x, (B, C, H, W), dtype=jnp.float32)
    embeddings = jax.random.uniform(
        k_w, (num_embeddings, C), dtype=jnp.float32,
        minval=-1.0 / num_embeddings, maxval=1.0 / num_embeddings)

    quantized, loss, indices = vector_quantizer_forward(
        x, embeddings, commitment_cost=commitment_cost, training=True)
    jax.block_until_ready((quantized, loss, indices))

    # sanity check against a pure-JAX reference (training mode)
    q_exp, loss_exp, idx_exp = _reference(x, embeddings, commitment_cost)
    assert quantized.shape == (B, C, H, W)
    assert indices.shape == (B * H * W,)
    assert bool(jnp.all(indices == idx_exp))
    assert jnp.allclose(quantized, q_exp, atol=1e-5, rtol=1e-5)
    # loss is computed via the distance identity (MXU default precision), so
    # allow float-rounding-level slack vs. the HIGHEST-precision reference.
    assert jnp.allclose(loss, loss_exp, atol=1e-4, rtol=1e-4)

    # eval-mode path
    q_eval, idx_eval = vector_quantizer_forward(
        x, embeddings, commitment_cost=commitment_cost, training=False)
    jax.block_until_ready((q_eval, idx_eval))
    assert bool(jnp.all(idx_eval == idx_exp))
    assert jnp.allclose(q_eval, q_exp, atol=1e-5, rtol=1e-5)

    print("KERNEL_OK")
</pallas_src>

<mosaic_0001>
module attributes {stable_mosaic.version = 11 : i64} {
  func.func @_vq_kernel(%arg0: i32, %arg1: i32, %arg2: memref<1x32x256xf32, #tpu.memory_space<vmem>>, %arg3: memref<64x32xf32, #tpu.memory_space<vmem>>, %arg4: memref<64x1xf32, #tpu.memory_space<vmem>>, %arg5: memref<1x32x256xf32, #tpu.memory_space<vmem>>, %arg6: memref<1x1x1x256xi32, #tpu.memory_space<vmem>>, %arg7: memref<1x1x1x256xf32, #tpu.memory_space<vmem>>) attributes {dimension_semantics = [#tpu.dimension_semantics<parallel>, #tpu.dimension_semantics<parallel>], iteration_bounds = array<i64: 2, 1>, scalar_prefetch = 0 : i64, scratch_operands = 0 : i64, tpu.core_type = #tpu.core_type<tc>, window_params = [{transform_indices = @transform_0, window_bounds = array<i64: 1, 32, 256>}, {pipeline_mode = #tpu.pipeline_mode<synchronous>, transform_indices = @transform_1, window_bounds = array<i64: 64, 32>}, {pipeline_mode = #tpu.pipeline_mode<synchronous>, transform_indices = @transform_2, window_bounds = array<i64: 64, 1>}, {transform_indices = @transform_3, window_bounds = array<i64: 1, 32, 256>}, {transform_indices = @transform_4, window_bounds = array<i64: 1, 1, 1, 256>}, {transform_indices = @transform_5, window_bounds = array<i64: 1, 1, 1, 256>}]} {
    %c0 = arith.constant 0 : index
    %c0_0 = arith.constant 0 : index
    %c0_1 = arith.constant 0 : index
    %0 = vector.load %arg2[%c0, %c0_0, %c0_1] : memref<1x32x256xf32, #tpu.memory_space<vmem>>, vector<1x32x256xf32>
    %1 = vector.shape_cast %0 : vector<1x32x256xf32> to vector<32x256xf32>
    %c0_2 = arith.constant 0 : index
    %c0_3 = arith.constant 0 : index
    %2 = vector.load %arg3[%c0_2, %c0_3] : memref<64x32xf32, #tpu.memory_space<vmem>>, vector<64x32xf32>
    %cst = arith.constant dense<0.000000e+00> : vector<64x256xf32>
    %3 = tpu.matmul %2, %1, %cst {dimension_numbers = #tpu.dot_dimension_numbers<[1], [0], [0], [1], [0, 0, 1, 1], [], []>} : vector<64x32xf32>, vector<32x256xf32>, vector<64x256xf32> -> vector<64x256xf32>
    %c0_4 = arith.constant 0 : index
    %c0_5 = arith.constant 0 : index
    %4 = vector.load %arg4[%c0_4, %c0_5] : memref<64x1xf32, #tpu.memory_space<vmem>>, vector<64x1xf32>
    %5 = vector.broadcast %4 : vector<64x1xf32> to vector<64x256xf32>
    %6 = arith.subf %5, %3 : vector<64x256xf32>
    %cst_6 = arith.constant dense<0x7F800000> : vector<256xf32>
    %7 = vector.multi_reduction <minimumf>, %6, %cst_6 [0] : vector<64x256xf32> to vector<256xf32>
    %8 = vector.shape_cast %7 : vector<256xf32> to vector<1x256xf32>
    %9 = tpu.iota {dimensions = array<i32: 0>} : vector<64x1xi32>
    %10 = arith.sitofp %9 : vector<64x1xi32> to vector<64x1xf32>
    %11 = vector.broadcast %8 : vector<1x256xf32> to vector<64x256xf32>
    %12 = arith.cmpf oeq, %6, %11 : vector<64x256xf32>
    %cst_7 = arith.constant 6.400000e+01 : f32
    %13 = vector.shape_cast %10 : vector<64x1xf32> to vector<64x1xf32>
    %14 = vector.broadcast %13 : vector<64x1xf32> to vector<64x256xf32>
    %15 = vector.broadcast %cst_7 : f32 to vector<64x256xf32>
    %16 = arith.select %12, %14, %15 : vector<64x256xi1>, vector<64x256xf32>
    %cst_8 = arith.constant dense<0x7F800000> : vector<256xf32>
    %17 = vector.multi_reduction <minimumf>, %16, %cst_8 [0] : vector<64x256xf32> to vector<256xf32>
    %18 = vector.shape_cast %17 : vector<256xf32> to vector<1x256xf32>
    %19 = arith.fptosi %18 : vector<1x256xf32> to vector<1x256xi32>
    %c0_9 = arith.constant 0 : index
    %c0_10 = arith.constant 0 : index
    %c0_11 = arith.constant 0 : index
    %c0_12 = arith.constant 0 : index
    %20 = vector.load %arg6[%c0_9, %c0_10, %c0_11, %c0_12] : memref<1x1x1x256xi32, #tpu.memory_space<vmem>>, vector<1x1x1x256xi32>
    %21 = vector.shape_cast %20 : vector<1x1x1x256xi32> to vector<1x256xi32>
    %22 = vector.shape_cast %19 : vector<1x256xi32> to vector<1x1x1x256xi32>
    tpu.vector_store %arg6[%c0_9, %c0_10, %c0_11, %c0_12], %22 {strides = array<i32>} : memref<1x1x1x256xi32, #tpu.memory_space<vmem>>, vector<1x1x1x256xi32>,
    %23 = vector.broadcast %10 : vector<64x1xf32> to vector<64x256xf32>
    %24 = vector.broadcast %18 : vector<1x256xf32> to vector<64x256xf32>
    %25 = arith.cmpf oeq, %23, %24 : vector<64x256xf32>
    %26 = arith.extui %25 : vector<64x256xi1> to vector<64x256xi32>
    %27 = arith.sitofp %26 : vector<64x256xi32> to vector<64x256xf32>
    %cst_13 = arith.constant dense<0.000000e+00> : vector<32x256xf32>
    %28 = tpu.matmul %2, %27, %cst_13 {dimension_numbers = #tpu.dot_dimension_numbers<[0], [0], [1], [1], [0, 1, 1, 1], [], []>} : vector<64x32xf32>, vector<64x256xf32>, vector<32x256xf32> -> vector<32x256xf32>
    %c0_14 = arith.constant 0 : index
    %c0_15 = arith.constant 0 : index
    %c0_16 = arith.constant 0 : index
    %29 = vector.load %arg5[%c0_14, %c0_15, %c0_16] : memref<1x32x256xf32, #tpu.memory_space<vmem>>, vector<1x32x256xf32>
    %30 = vector.shape_cast %29 : vector<1x32x256xf32> to vector<32x256xf32>
    %31 = vector.shape_cast %28 : vector<32x256xf32> to vector<1x32x256xf32>
    tpu.vector_store %arg5[%c0_14, %c0_15, %c0_16], %31 {strides = array<i32>} : memref<1x32x256xf32, #tpu.memory_space<vmem>>, vector<1x32x256xf32>,
    %32 = arith.mulf %1, %1 : vector<32x256xf32>
    %cst_17 = arith.constant dense<0.000000e+00> : vector<256xf32>
    %33 = vector.multi_reduction <add>, %32, %cst_17 [0] : vector<32x256xf32> to vector<256xf32>
    %34 = vector.shape_cast %33 : vector<256xf32> to vector<1x256xf32>
    %cst_18 = arith.constant 2.000000e+00 : f32
    %35 = vector.broadcast %cst_18 : f32 to vector<1x256xf32>
    %36 = arith.mulf %35, %8 : vector<1x256xf32>
    %37 = arith.addf %34, %36 : vector<1x256xf32>
    %c0_19 = arith.constant 0 : index
    %c0_20 = arith.constant 0 : index
    %c0_21 = arith.constant 0 : index
    %c0_22 = arith.constant 0 : index
    %38 = vector.load %arg7[%c0_19, %c0_20, %c0_21, %c0_22] : memref<1x1x1x256xf32, #tpu.memory_space<vmem>>, vector<1x1x1x256xf32>
    %39 = vector.shape_cast %38 : vector<1x1x1x256xf32> to vector<1x256xf32>
    %40 = vector.shape_cast %37 : vector<1x256xf32> to vector<1x1x1x256xf32>
    tpu.vector_store %arg7[%c0_19, %c0_20, %c0_21, %c0_22], %40 {strides = array<i32>} : memref<1x1x1x256xf32, #tpu.memory_space<vmem>>, vector<1x1x1x256xf32>,
    return
  }
  func.func @transform_0(%arg0: i32, %arg1: i32) -> (i32, i32, i32) {
    %c0_i32 = arith.constant 0 : i32
    %c0_i32_0 = arith.constant 0 : i32
    return %arg0, %c0_i32, %arg1 : i32, i32, i32
  }
  func.func @transform_1(%arg0: i32, %arg1: i32) -> (i32, i32) {
    %c0_i32 = arith.constant 0 : i32
    %c0_i32_0 = arith.constant 0 : i32
    %c0_i32_1 = arith.constant 0 : i32
    return %c0_i32, %c0_i32_0 : i32, i32
  }
  func.func @transform_2(%arg0: i32, %arg1: i32) -> (i32, i32) {
    %c0_i32 = arith.constant 0 : i32
    %c0_i32_0 = arith.constant 0 : i32
    %c0_i32_1 = arith.constant 0 : i32
    return %c0_i32, %c0_i32_0 : i32, i32
  }
  func.func @transform_3(%arg0: i32, %arg1: i32) -> (i32, i32, i32) {
    %c0_i32 = arith.constant 0 : i32
    %c0_i32_0 = arith.constant 0 : i32
    return %arg0, %c0_i32, %arg1 : i32, i32, i32
  }
  func.func @transform_4(%arg0: i32, %arg1: i32) -> (i32, i32, i32, i32) {
    %c0_i32 = arith.constant 0 : i32
    %c0_i32_0 = arith.constant 0 : i32
    %c0_i32_1 = arith.constant 0 : i32
    return %arg0, %arg1, %c0_i32, %c0_i32_0 : i32, i32, i32, i32
  }
  func.func @transform_5(%arg0: i32, %arg1: i32) -> (i32, i32, i32, i32) {
    %c0_i32 = arith.constant 0 : i32
    %c0_i32_0 = arith.constant 0 : i32
    %c0_i32_1 = arith.constant 0 : i32
    return %arg0, %arg1, %c0_i32, %c0_i32_0 : i32, i32, i32, i32
  }
}

</mosaic_0001>

<llo_original>
// kernel: tpu_custom_call.1
$region0: #{tpu_custom_call.1}
  #allocation0 [shape = 'u32[]', space=smem, size = 0x4, offset = 0x4, fixed_abs, tag = 'smem constant byte address 0x4 - core index']
  #allocation1 [shape = 'u32[144,128]{1,0:T(1,128)}', space=vmem, size = 0x12000, scoped, tag = 'internal scratch']
  %s0 = inlined_call_operand.vmem [shape: f32[2,32,256], index: 0, kind: input, shape index: {}]
  %s1 = inlined_call_operand.vmem [shape: f32[64,32], index: 1, kind: input, shape index: {}]
  %s2 = inlined_call_operand.vmem [shape: f32[64,1], index: 2, kind: input, shape index: {}]
  %s3 = inlined_call_operand.hbm [shape: f32[2,32,256], index: 3, kind: output, shape index: {0}]
  %s4 = inlined_call_operand.hbm [shape: s32[2,1,1,256], index: 4, kind: output, shape index: {1}]
  %s5 = inlined_call_operand.hbm [shape: f32[2,1,1,256], index: 5, kind: output, shape index: {2}]
  %6 = xla_tuple %s3, %s4, %s5
  %s7 = sld [smem:[#allocation0]]
  $region61: #{tpu_custom_call.1} parent=0
    _
  %s9 = ssub.s32 1, %s7
  %s10 = scalar_select 0, %s9, %s7
  $region1: #{tpu_custom_call.1} parent=0
    #allocation2 [shape = 'u8[65536]{0}', space=vmem, size = 0x10000, scoped, tag = 'output window, operand 0']
    #allocation3 [shape = 's32[2]{0}', space=sflag, size = 0x8, scoped, tag = 'scoped memory for tpu_custom_call.1']
    #allocation4 [shape = 'u8[2048]{0}', space=vmem, size = 0x800, scoped, tag = 'output window, operand 1']
    #allocation5 [shape = 's32[2]{0}', space=sflag, size = 0x8, scoped, tag = 'scoped memory for tpu_custom_call.1']
    #allocation6 [shape = 'u8[2048]{0}', space=vmem, size = 0x800, scoped, tag = 'output window, operand 2']
    %11 = vsyncpa [#allocation3], 0
    %s12 = scalar_lea.sflag [#allocation3], 1
    %13 = vsyncpa %s12, 0
    %14 = vsyncpa [#allocation5], 0
    %s15 = scalar_lea.sflag [#allocation5], 1
    %16 = vsyncpa %s15, 0
    loop: start=0, step=1, limit=4
    $region2: #{tpu_custom_call.1} parent=1 // loop_pre_header
      _
    $region3: #{tpu_custom_call.1} parent=1 // loop_header
      %s18 = sphi 0, %s22
      %p19 = scmp.ge.s32.totalorder %s18, 4
      %s25 = sphi 0, %s37
      %s26 = sphi 0, %s33
      %s27 = sphi 0, %s25
      %s28 = sphi 0, %s26
      %s29 = sphi 0, %s27
      %s30 = sphi 0, %s28
      %s42 = sphi 0, %s44
      %s45 = sphi 0, %s42
      %s46 = sphi 0, %s45
      %s62 = sphi 0, %s46
      %s66 = sphi 0, %s66
      %s68 = sphi 0, %s66
      %s69 = sphi 0, %s68
      %s83 = sphi 0, %s69
      %s87 = sphi 0, %s87
      %s89 = sphi 0, %s87
      %s90 = sphi 0, %s89
      %s104 = sphi 0, %s90
      %s112 = sphi 0, %s114
      %s115 = sphi 0, %s112
      %s116 = sphi 0, %s115
      %s132 = sphi 0, %s116
      %s140 = sphi 0, %s142
      %s143 = sphi 0, %s140
      %s144 = sphi 0, %s143
      %s160 = sphi 0, %s144
      %s168 = sphi 0, %s170
      %s171 = sphi 0, %s168
      %s172 = sphi 0, %s171
      %s188 = sphi 0, %s172
    $region4: #{tpu_custom_call.1} parent=1 // loop_header_branch
      %21 = sbr.rel (%p19) target = $region8
    $region5: #{tpu_custom_call.1} parent=1 // loop_body
      %s23 = ssub.s32 %s18, 1
      %s24 = ssub.s32 %s18, 2
      %s31 = sadd.s32 1, %s26
      %p32 = scmp.ge.s32.totalorder %s31, 1
      %s33 = scalar_select %p32, 0, %s31
      %s34 = sadd.s32 1, %s25
      %s35 = scalar_select %p32, %s34, %s25
      %p36 = scmp.ge.s32.totalorder %s35, 2
      %s37 = scalar_select %p36, 0, %s35
      %s38 = ssub.s32 %s25, %s37
      %s39 = ssub.s32 %s26, %s33
      %s40 = sor.u32 %s38, %s39
      %p41 = scmp.eq.s32.totalorder %s40, 0
      %s43 = sadd.s32 %s42, 1
      %s44 = scalar_select %p41, %s42, %s43
      %p47 = pneg %p41
      %p48 = scmp.eq.s32.totalorder %s18, 1
      %p49 = por %p47, %p48
      %p50 = scmp.ne.s32.totalorder %s42, %s45
      %p51 = scmp.eq.s32.totalorder %s18, 0
      %p52 = por %p50, %p51
      %p53 = scmp.ne.s32.totalorder %s42, %s45
      %p54 = scmp.eq.s32.totalorder %s23, 1
      %p55 = por %p53, %p54
      %p56 = scmp.ne.s32.totalorder %s45, %s46
      %p57 = scmp.eq.s32.totalorder %s23, 0
      %p58 = por %p56, %p57
      %p59 = scmp.ne.s32.totalorder %s45, %s46
      %p60 = scmp.eq.s32.totalorder %s24, 1
      %p61 = por %p59, %p60
      %p63 = scmp.ne.s32.totalorder %s46, %s62
      %p64 = scmp.eq.s32.totalorder %s24, 0
      %p65 = por %p63, %p64
      %s67 = sadd.s32 %s66, 1
      %p70 = scmp.eq.s32.totalorder %s18, 1
      %p71 = scmp.ne.s32.totalorder %s66, %s68
      %p72 = scmp.eq.s32.totalorder %s18, 0
      %p73 = por %p71, %p72
      %p74 = scmp.ne.s32.totalorder %s66, %s68
      %p75 = scmp.eq.s32.totalorder %s23, 1
      %p76 = por %p74, %p75
      %p77 = scmp.ne.s32.totalorder %s68, %s69
      %p78 = scmp.eq.s32.totalorder %s23, 0
      %p79 = por %p77, %p78
      %p80 = scmp.ne.s32.totalorder %s68, %s69
      %p81 = scmp.eq.s32.totalorder %s24, 1
      %p82 = por %p80, %p81
      %p84 = scmp.ne.s32.totalorder %s69, %s83
      %p85 = scmp.eq.s32.totalorder %s24, 0
      %p86 = por %p84, %p85
      %s88 = sadd.s32 %s87, 1
      %p91 = scmp.eq.s32.totalorder %s18, 1
      %p92 = scmp.ne.s32.totalorder %s87, %s89
      %p93 = scmp.eq.s32.totalorder %s18, 0
      %p94 = por %p92, %p93
      %p95 = scmp.ne.s32.totalorder %s87, %s89
      %p96 = scmp.eq.s32.totalorder %s23, 1
      %p97 = por %p95, %p96
      %p98 = scmp.ne.s32.totalorder %s89, %s90
      %p99 = scmp.eq.s32.totalorder %s23, 0
      %p100 = por %p98, %p99
      %p101 = scmp.ne.s32.totalorder %s89, %s90
      %p102 = scmp.eq.s32.totalorder %s24, 1
      %p103 = por %p101, %p102
      %p105 = scmp.ne.s32.totalorder %s90, %s104
      %p106 = scmp.eq.s32.totalorder %s24, 0
      %p107 = por %p105, %p106
      %s108 = ssub.s32 %s25, %s37
      %s109 = ssub.s32 %s26, %s33
      %s110 = sor.u32 %s108, %s109
      %p111 = scmp.eq.s32.totalorder %s110, 0
      %s113 = sadd.s32 %s112, 1
      %s114 = scalar_select %p111, %s112, %s113
      %p117 = pneg %p111
      %p118 = scmp.eq.s32.totalorder %s18, 1
      %p119 = por %p117, %p118
      %p120 = scmp.ne.s32.totalorder %s112, %s115
      %p121 = scmp.eq.s32.totalorder %s18, 0
      %p122 = por %p120, %p121
      %p123 = scmp.ne.s32.totalorder %s112, %s115
      %p124 = scmp.eq.s32.totalorder %s23, 1
      %p125 = por %p123, %p124
      %p126 = scmp.ne.s32.totalorder %s115, %s116
      %p127 = scmp.eq.s32.totalorder %s23, 0
      %p128 = por %p126, %p127
      %p129 = scmp.ne.s32.totalorder %s115, %s116
      %p130 = scmp.eq.s32.totalorder %s24, 1
      %p131 = por %p129, %p130
      %p133 = scmp.ne.s32.totalorder %s116, %s132
      %p134 = scmp.eq.s32.totalorder %s24, 0
      %p135 = por %p133, %p134
      %s136 = ssub.s32 %s25, %s37
      %s137 = ssub.s32 %s26, %s33
      %s138 = sor.u32 %s136, %s137
      %p139 = scmp.eq.s32.totalorder %s138, 0
      %s141 = sadd.s32 %s140, 1
      %s142 = scalar_select %p139, %s140, %s141
      %p145 = pneg %p139
      %p146 = scmp.eq.s32.totalorder %s18, 1
      %p147 = por %p145, %p146
      %p148 = scmp.ne.s32.totalorder %s140, %s143
      %p149 = scmp.eq.s32.totalorder %s18, 0
      %p150 = por %p148, %p149
      %p151 = scmp.ne.s32.totalorder %s140, %s143
      %p152 = scmp.eq.s32.totalorder %s23, 1
      %p153 = por %p151, %p152
      %p154 = scmp.ne.s32.totalorder %s143, %s144
      %p155 = scmp.eq.s32.totalorder %s23, 0
      %p156 = por %p154, %p155
      %p157 = scmp.ne.s32.totalorder %s143, %s144
      %p158 = scmp.eq.s32.totalorder %s24, 1
      %p159 = por %p157, %p158
      %p161 = scmp.ne.s32.totalorder %s144, %s160
      %p162 = scmp.eq.s32.totalorder %s24, 0
      %p163 = por %p161, %p162
      %s164 = ssub.s32 %s25, %s37
      %s165 = ssub.s32 %s26, %s33
      %s166 = sor.u32 %s164, %s165
      %p167 = scmp.eq.s32.totalorder %s166, 0
      %s169 = sadd.s32 %s168, 1
      %s170 = scalar_select %p167, %s168, %s169
      %p173 = pneg %p167
      %p174 = scmp.eq.s32.totalorder %s18, 1
      %p175 = por %p173, %p174
      %p176 = scmp.ne.s32.totalorder %s168, %s171
      %p177 = scmp.eq.s32.totalorder %s18, 0
      %p178 = por %p176, %p177
      %p179 = scmp.ne.s32.totalorder %s168, %s171
      %p180 = scmp.eq.s32.totalorder %s23, 1
      %p181 = por %p179, %p180
      %p182 = scmp.ne.s32.totalorder %s171, %s172
      %p183 = scmp.eq.s32.totalorder %s23, 0
      %p184 = por %p182, %p183
      %p185 = scmp.ne.s32.totalorder %s171, %s172
      %p186 = scmp.eq.s32.totalorder %s24, 1
      %p187 = por %p185, %p186
      %p189 = scmp.ne.s32.totalorder %s172, %s188
      %p190 = scmp.eq.s32.totalorder %s24, 0
      %p191 = por %p189, %p190
      %p192 = scmp.le.s32.totalorder 1, %s18
      %p193 = scmp.lt.s32.totalorder %s18, 3
      %p194 = pnand %p192, %p193
      %p195 = pneg %p194
      // Predicated region
      $region9: #{tpu_custom_call.1} parent=5 // pred_check
        _
      $region10: #{tpu_custom_call.1} parent=5 // pred_check_branch
        %197 = sbr.rel (%p194) target = $region12
      $region11: #{tpu_custom_call.1} parent=5 // pred_region
        %s198 = ssub.s32 %s18, 1
        // Predicated region
        $region13: #{tpu_custom_call.1} parent=11 // pred_check
          %p199 = pneg %p79
        $region14: #{tpu_custom_call.1} parent=11 // pred_check_branch
          %201 = sbr.rel (%p199) target = $region16
        $region15: #{tpu_custom_call.1} parent=11 // pred_region
          _
        $region16: #{tpu_custom_call.1} parent=11 // pred_fallthru
          _
        // Predicated region
        $region17: #{tpu_custom_call.1} parent=11 // pred_check
          %p202 = pneg %p100
        $region18: #{tpu_custom_call.1} parent=11 // pred_check_branch
          %204 = sbr.rel (%p202) target = $region20
        $region19: #{tpu_custom_call.1} parent=11 // pred_region
          _
        $region20: #{tpu_custom_call.1} parent=11 // pred_fallthru
          _
      $region12: #{tpu_custom_call.1} parent=5 // pred_fallthru
        _
      %p205 = scmp.lt.s32.totalorder %s18, 2
      // Predicated region
      $region21: #{tpu_custom_call.1} parent=5 // pred_check
        %p206 = pneg %p205
      $region22: #{tpu_custom_call.1} parent=5 // pred_check_branch
        %208 = sbr.rel (%p206) target = $region24
      $region23: #{tpu_custom_call.1} parent=5 // pred_region
        // Predicated region
        $region25: #{tpu_custom_call.1} parent=23 // pred_check
          %p209 = pneg %p52
        $region26: #{tpu_custom_call.1} parent=23 // pred_check_branch
          %211 = sbr.rel (%p209) target = $region28
        $region27: #{tpu_custom_call.1} parent=23 // pred_region
          %s212 = smul.u32 2, %s26
          %p213 = scmp.lt.s32.totalorder %s25, 1
          %s214 = scalar_select %p213, %s25, 1
          %p215 = scmp.lt.s32.totalorder %s212, 1
          %s216 = scalar_select %p215, %s212, 1
          %s217 = smul.addr %s214, 8
          %s218 = sadd.s32 %s216, %s217
          %s219 = smul.addr %s218, 8
          %s220 = scalar_lea.vmem %s0, %s219
          %s221 = smul.u32 2, %s26
        $region28: #{tpu_custom_call.1} parent=23 // pred_fallthru
          _
      $region24: #{tpu_custom_call.1} parent=5 // pred_fallthru
        _
      %p222 = scmp.le.s32.totalorder 1, %s18
      %p223 = scmp.lt.s32.totalorder %s18, 3
      %p224 = pnand %p222, %p223
      %p225 = pneg %p224
      // Predicated region
      $region29: #{tpu_custom_call.1} parent=5 // pred_check
        _
      $region30: #{tpu_custom_call.1} parent=5 // pred_check_branch
        %227 = sbr.rel (%p224) target = $region32
      $region31: #{tpu_custom_call.1} parent=5 // pred_region
        %s228 = ssub.s32 %s18, 1
        %s229 = smul.u32 2, %s28
        %p230 = scmp.lt.s32.totalorder %s27, 1
        %s231 = scalar_select %p230, %s27, 1
        %p232 = scmp.lt.s32.totalorder %s229, 1
        %s233 = scalar_select %p232, %s229, 1
        %s234 = smul.addr %s231, 8
        %s235 = sadd.s32 %s233, %s234
        %s236 = smul.addr %s235, 8
        %s237 = scalar_lea.vmem %s0, %s236
        %p238 = pneg %p58
        %p239 = pneg %p55
        %p240 = pneg %p79
        %p241 = pneg %p76
        %p242 = pneg %p100
        %p243 = pneg %p97
        %p244 = pneg %p128
        %p245 = pneg %p125
        %s246 = sand.u32 %s115, 1
        %s247 = scalar_lea.sflag [#allocation3], %s246
        %s248 = sand.u32 %s115, 1
        %s249 = smul.addr %s248, 64
        %s250 = scalar_lea.vmem [#allocation2], %s249
        %p251 = pneg %p156
        %p252 = pneg %p153
        %s253 = sand.u32 %s23, 1
        %s254 = scalar_lea.sflag [#allocation5], %s253
        %s255 = sand.u32 %s143, 1
        %s256 = smul.addr %s255, 2
        %s257 = scalar_lea.vmem [#allocation4], %s256
        %p258 = pneg %p184
        %p259 = pneg %p181
        %s260 = sand.u32 %s23, 1
        %s261 = scalar_lea.sflag [#allocation5], %s260
        %s262 = sand.u32 %s171, 1
        %s263 = smul.addr %s262, 2
        %s264 = scalar_lea.vmem [#allocation6], %s263
        %s265 = smul.u32 2, %s28
        %p266 = scmp.lt.s32.totalorder %s27, 1
        %s267 = scalar_select %p266, %s27, 1
        %p268 = scmp.lt.s32.totalorder %s265, 1
        %s269 = scalar_select %p268, %s265, 1
        %s270 = smul.addr %s267, 8
        %s271 = sadd.s32 %s269, %s270
        %s272 = smul.addr %s271, 8
        %s273 = scalar_lea.vmem %s0, %s272
        %s274 = smul.u32 2, %s28
        %s275 = smul.u32 2, %s28
        %v276 = vld [vmem:[%s273] sm:$0xff]
        %v277 = vld [vmem:[%s273 + $0x8] sm:$0xff]
        %v278 = vld [vmem:[%s273 + $0x10] sm:$0xff]
        %v279 = vld [vmem:[%s273 + $0x18] sm:$0xff]
        %v280 = vld [vmem:[%s273 + $0x20] sm:$0xff]
        %v281 = vld [vmem:[%s273 + $0x28] sm:$0xff]
        %v282 = vld [vmem:[%s273 + $0x30] sm:$0xff]
        %v283 = vld [vmem:[%s273 + $0x38] sm:$0xff]
        %v284 = vld [vmem:[%s1] sm:$0xff]
        %v285 = vld [vmem:[%s1 + $0x8] sm:$0xff]
        %v286 = vld [vmem:[%s1 + $0x10] sm:$0xff]
        %v287 = vld [vmem:[%s1 + $0x18] sm:$0xff]
        %v288 = vld [vmem:[%s1 + $0x20] sm:$0xff]
        %v289 = vld [vmem:[%s1 + $0x28] sm:$0xff]
        %v290 = vld [vmem:[%s1 + $0x30] sm:$0xff]
        %v291 = vld [vmem:[%s1 + $0x38] sm:$0xff]
        %vm292 = vcmask 261120
        %v294 = vsel %vm292, %v284, 0
        %v297 = vsel %vm292, %v285, 0
        %v300 = vsel %vm292, %v286, 0
        %v303 = vsel %vm292, %v287, 0
        %v306 = vsel %vm292, %v288, 0
        %v309 = vsel %vm292, %v289, 0
        %v312 = vsel %vm292, %v290, 0
        %v315 = vsel %vm292, %v291, 0
        %317 = vmatprep.subr.mxu0 %v277
        %318 = vmatpush1.msra.mxu0 %v276
        %319 = vmatprep.subr.mxu0 %v279
        %320 = vmatpush1.msra.mxu0 %v278
        %321 = vmatprep.subr.mxu0 %v281
        %322 = vmatpush1.msra.mxu0 %v280
        %323 = vmatprep.subr.mxu0 %v283
        %324 = vmatpush1.msra.mxu0 %v282
        %325 = vmatprep.subr.mxu0 0.0
        %326 = vmatpush1.msra.mxu0 0.0
        %327 = vmatprep.subr.mxu0 0.0
        %328 = vmatpush1.msra.mxu0 0.0
        %329 = vmatprep.subr.mxu0 0.0
        %330 = vmatpush1.msra.mxu0 0.0
        %331 = vmatprep.subr.mxu0 0.0
        %332 = vmatpush1.msra.mxu0 0.0
        %333 = vmatprep.subr.mxu0 0.0
        %334 = vmatpush1.msra.mxu0 0.0
        %335 = vmatprep.subr.mxu0 0.0
        %336 = vmatpush1.msra.mxu0 0.0
        %337 = vmatprep.subr.mxu0 0.0
        %338 = vmatpush1.msra.mxu0 0.0
        %339 = vmatprep.subr.mxu0 0.0
        %340 = vmatpush1.msra.mxu0 0.0
        %341 = vmatprep.subr.mxu0 0.0
        %342 = vmatpush1.msra.mxu0 0.0
        %343 = vmatprep.subr.mxu0 0.0
        %344 = vmatpush1.msra.mxu0 0.0
        %345 = vmatprep.subr.mxu0 0.0
        %346 = vmatpush1.msra.mxu0 0.0
        %347 = vmatprep.subr.mxu0 0.0
        %348 = vmatpush1.msra.mxu0 0.0
        %349 = vmatprep.subr.mxu0 0.0
        %350 = vmatpush1.msra.mxu0 0.0
        %351 = vmatprep.subr.mxu0 0.0
        %352 = vmatpush1.msra.mxu0 0.0
        %353 = vmatprep.subr.mxu0 0.0
        %354 = vmatpush1.msra.mxu0 0.0
        %355 = vmatprep.subr.mxu0 0.0
        %356 = vmatpush1.msra.mxu0 0.0
        %357 = vmatprep.subr.mxu0 0.0
        %358 = vmatpush1.msra.mxu0 0.0
        %359 = vmatprep.subr.mxu0 0.0
        %360 = vmatpush1.msra.mxu0 0.0
        %361 = vmatprep.subr.mxu0 0.0
        %362 = vmatpush1.msra.mxu0 0.0
        %363 = vmatprep.subr.mxu0 0.0
        %364 = vmatpush1.msra.mxu0 0.0
        %365 = vmatprep.subr.mxu0 0.0
        %366 = vmatpush1.msra.mxu0 0.0
        %367 = vmatprep.subr.mxu0 0.0
        %368 = vmatpush1.msra.mxu0 0.0
        %369 = vmatprep.subr.mxu0 0.0
        %370 = vmatpush1.msra.mxu0 0.0
        %371 = vmatprep.subr.mxu0 0.0
        %372 = vmatpush1.msra.mxu0 0.0
        %373 = vmatprep.subr.mxu0 0.0
        %374 = vmatpush1.msra.mxu0 0.0
        %375 = vmatprep.subr.mxu0 0.0
        %376 = vmatpush1.msra.mxu0 0.0
        %377 = vmatprep.subr.mxu0 0.0
        %378 = vmatpush1.msra.mxu0 0.0
        %379 = vmatprep.subr.mxu0 0.0
        %380 = vmatpush1.msra.mxu0 0.0
        %381 = vmatprep.mubr.f32.mxu0 0.0
        %382 = vmatmul.mubr.f32.gmra.mrb[0].mxu0 %v294
        %v383 = vpop.f32.mrb[0].mxu0
        %v384 = vadd.f32 0.0, %v383
        %v385 = vpop.f32.mrb[0].mxu0
        %v386 = vadd.f32 0.0, %v385
        %387 = vmatprep.mubr.f32.mxu0 0.0
        %388 = vmatmul.mubr.f32.gmra.mrb[0].mxu0 %v297
        %v389 = vpop.f32.mrb[0].mxu0
        %v390 = vadd.f32 0.0, %v389
        %v391 = vpop.f32.mrb[0].mxu0
        %v392 = vadd.f32 0.0, %v391
        %393 = vmatprep.mubr.f32.mxu0 0.0
        %394 = vmatmul.mubr.f32.gmra.mrb[0].mxu0 %v300
        %v395 = vpop.f32.mrb[0].mxu0
        %v396 = vadd.f32 0.0, %v395
        %v397 = vpop.f32.mrb[0].mxu0
        %v398 = vadd.f32 0.0, %v397
        %399 = vmatprep.mubr.f32.mxu0 0.0
        %400 = vmatmul.mubr.f32.gmra.mrb[0].mxu0 %v303
        %v401 = vpop.f32.mrb[0].mxu0
        %v402 = vadd.f32 0.0, %v401
        %v403 = vpop.f32.mrb[0].mxu0
        %v404 = vadd.f32 0.0, %v403
        %405 = vmatprep.mubr.f32.mxu0 0.0
        %406 = vmatmul.mubr.f32.gmra.mrb[0].mxu0 %v306
        %v407 = vpop.f32.mrb[0].mxu0
        %v408 = vadd.f32 0.0, %v407
        %v409 = vpop.f32.mrb[0].mxu0
        %v410 = vadd.f32 0.0, %v409
        %411 = vmatprep.mubr.f32.mxu0 0.0
        %412 = vmatmul.mubr.f32.gmra.mrb[0].mxu0 %v309
        %v413 = vpop.f32.mrb[0].mxu0
        %v414 = vadd.f32 0.0, %v413
        %v415 = vpop.f32.mrb[0].mxu0
        %v416 = vadd.f32 0.0, %v415
        %417 = vmatprep.mubr.f32.mxu0 0.0
        %418 = vmatmul.mubr.f32.gmra.mrb[0].mxu0 %v312
        %v419 = vpop.f32.mrb[0].mxu0
        %v420 = vadd.f32 0.0, %v419
        %v421 = vpop.f32.mrb[0].mxu0
        %v422 = vadd.f32 0.0, %v421
        %423 = vmatprep.mubr.f32.mxu0 0.0
        %424 = vmatmul.mubr.f32.gmra.mrb[0].mxu0 %v315
        %v425 = vpop.f32.mrb[0].mxu0
        %v426 = vadd.f32 0.0, %v425
        %v427 = vpop.f32.mrb[0].mxu0
        %v428 = vadd.f32 0.0, %v427
        %429 = vdwg.mxu0
        %v430 = vld [vmem:[%s2] sm:$0xff]
        %v431 = vld [vmem:[%s2 + $0x8] sm:$0xff]
        %v432 = vld [vmem:[%s2 + $0x10] sm:$0xff]
        %v433 = vld [vmem:[%s2 + $0x18] sm:$0xff]
        %v434 = vld [vmem:[%s2 + $0x20] sm:$0xff]
        %v435 = vld [vmem:[%s2 + $0x28] sm:$0xff]
        %v436 = vld [vmem:[%s2 + $0x30] sm:$0xff]
        %v437 = vld [vmem:[%s2 + $0x38] sm:$0xff]
        %439 = vset.pattern.permute.xlu0 0
        %440 = vperm.xlu0 %439, %v430
        %v441 = vpop.permute.xlu0 %440
        %444 = vset.pattern.permute.xlu0 0
        %445 = vperm.xlu0 %444, %v431
        %v446 = vpop.permute.xlu0 %445
        %449 = vset.pattern.permute.xlu0 0
        %450 = vperm.xlu0 %449, %v432
        %v451 = vpop.permute.xlu0 %450
        %454 = vset.pattern.permute.xlu0 0
        %455 = vperm.xlu0 %454, %v433
        %v456 = vpop.permute.xlu0 %455
        %459 = vset.pattern.permute.xlu0 0
        %460 = vperm.xlu0 %459, %v434
        %v461 = vpop.permute.xlu0 %460
        %464 = vset.pattern.permute.xlu0 0
        %465 = vperm.xlu0 %464, %v435
        %v466 = vpop.permute.xlu0 %465
        %469 = vset.pattern.permute.xlu0 0
        %470 = vperm.xlu0 %469, %v436
        %v471 = vpop.permute.xlu0 %470
        %474 = vset.pattern.permute.xlu0 0
        %475 = vperm.xlu0 %474, %v437
        %v476 = vpop.permute.xlu0 %475
        %v478 = vsub.f32 %v441, %v384
        %v479 = vsub.f32 %v441, %v386
        %v480 = vsub.f32 %v446, %v390
        %v481 = vsub.f32 %v446, %v392
        %v482 = vsub.f32 %v451, %v396
        %v483 = vsub.f32 %v451, %v398
        %v484 = vsub.f32 %v456, %v402
        %v485 = vsub.f32 %v456, %v404
        %v486 = vsub.f32 %v461, %v408
        %v487 = vsub.f32 %v461, %v410
        %v488 = vsub.f32 %v466, %v414
        %v489 = vsub.f32 %v466, %v416
        %v490 = vsub.f32 %v471, %v420
        %v491 = vsub.f32 %v471, %v422
        %v492 = vsub.f32 %v476, %v426
        %v493 = vsub.f32 %v476, %v428
        %v494 = vmin.f32 %v478, %v482
        %v495 = vmin.f32 %v480, %v484
        %v496 = vmin.f32 %v494, %v486
        %v497 = vmin.f32 %v495, %v488
        %v498 = vmin.f32 %v496, %v490
        %v499 = vmin.f32 %v497, %v492
        %v500 = vmin.f32 %v498, %v499
        %v501 = vrot.slane %v500, 4
        %v502 = vmin.f32 %v500, %v501
        %v503 = vrot.slane %v502, 2
        %v504 = vmin.f32 %v502, %v503
        %v505 = vrot.slane %v504, 1
        %v506 = vmin.f32 %v504, %v505
        %v507 = vmin.f32 %v479, %v483
        %v508 = vmin.f32 %v481, %v485
        %v509 = vmin.f32 %v507, %v487
        %v510 = vmin.f32 %v508, %v489
        %v511 = vmin.f32 %v509, %v491
        %v512 = vmin.f32 %v510, %v493
        %v513 = vmin.f32 %v511, %v512
        %v514 = vrot.slane %v513, 4
        %v515 = vmin.f32 %v513, %v514
        %v516 = vrot.slane %v515, 2
        %v517 = vmin.f32 %v515, %v516
        %v518 = vrot.slane %v517, 1
        %v519 = vmin.f32 %v517, %v518
        %v520 = vlaneseq
        %v521 = vshrl.u32 %v520, 7
        %v522 = vadd.s32 %v521, 8
        %v523 = vadd.s32 %v521, 16
        %v524 = vadd.s32 %v521, 24
        %v525 = vadd.s32 %v521, 32
        %v526 = vadd.s32 %v521, 40
        %v527 = vadd.s32 %v521, 48
        %v528 = vadd.s32 %v521, 56
        %v529 = vcvt.s32.f32 %v521
        %v530 = vcvt.s32.f32 %v522
        %v531 = vcvt.s32.f32 %v523
        %v532 = vcvt.s32.f32 %v524
        %v533 = vcvt.s32.f32 %v525
        %v534 = vcvt.s32.f32 %v526
        %v535 = vcvt.s32.f32 %v527
        %v536 = vcvt.s32.f32 %v528
        %vm537 = vcmp.eq.f32.partialorder %v478, %v506
        %vm538 = vcmp.eq.f32.partialorder %v479, %v519
        %vm539 = vcmp.eq.f32.partialorder %v480, %v506
        %vm540 = vcmp.eq.f32.partialorder %v481, %v519
        %vm541 = vcmp.eq.f32.partialorder %v482, %v506
        %vm542 = vcmp.eq.f32.partialorder %v483, %v519
        %vm543 = vcmp.eq.f32.partialorder %v484, %v506
        %vm544 = vcmp.eq.f32.partialorder %v485, %v519
        %vm545 = vcmp.eq.f32.partialorder %v486, %v506
        %vm546 = vcmp.eq.f32.partialorder %v487, %v519
        %vm547 = vcmp.eq.f32.partialorder %v488, %v506
        %vm548 = vcmp.eq.f32.partialorder %v489, %v519
        %vm549 = vcmp.eq.f32.partialorder %v490, %v506
        %vm550 = vcmp.eq.f32.partialorder %v491, %v519
        %vm551 = vcmp.eq.f32.partialorder %v492, %v506
        %vm552 = vcmp.eq.f32.partialorder %v493, %v519
        %v553 = vsel %vm537, %v529, 64.0
        %v554 = vsel %vm538, %v529, 64.0
        %v555 = vsel %vm539, %v530, 64.0
        %v556 = vsel %vm540, %v530, 64.0
        %v557 = vsel %vm541, %v531, 64.0
        %v558 = vsel %vm542, %v531, 64.0
        %v559 = vsel %vm543, %v532, 64.0
        %v560 = vsel %vm544, %v532, 64.0
        %v561 = vsel %vm545, %v533, 64.0
        %v562 = vsel %vm546, %v533, 64.0
        %v563 = vsel %vm547, %v534, 64.0
        %v564 = vsel %vm548, %v534, 64.0
        %v565 = vsel %vm549, %v535, 64.0
        %v566 = vsel %vm550, %v535, 64.0
        %v567 = vsel %vm551, %v536, 64.0
        %v568 = vsel %vm552, %v536, 64.0
        %v569 = vmin.f32 %v553, %v557
        %v570 = vmin.f32 %v555, %v559
        %v571 = vmin.f32 %v569, %v561
        %v572 = vmin.f32 %v570, %v563
        %v573 = vmin.f32 %v571, %v565
        %v574 = vmin.f32 %v572, %v567
        %v575 = vmin.f32 %v573, %v574
        %v576 = vrot.slane %v575, 4
        %v577 = vmin.f32 %v575, %v576
        %v578 = vrot.slane %v577, 2
        %v579 = vmin.f32 %v577, %v578
        %v580 = vrot.slane %v579, 1
        %v581 = vmin.f32 %v579, %v580
        %v582 = vmin.f32 %v554, %v558
        %v583 = vmin.f32 %v556, %v560
        %v584 = vmin.f32 %v582, %v562
        %v585 = vmin.f32 %v583, %v564
        %v586 = vmin.f32 %v584, %v566
        %v587 = vmin.f32 %v585, %v568
        %v588 = vmin.f32 %v586, %v587
        %v589 = vrot.slane %v588, 4
        %v590 = vmin.f32 %v588, %v589
        %v591 = vrot.slane %v590, 2
        %v592 = vmin.f32 %v590, %v591
        %v593 = vrot.slane %v592, 1
        %v594 = vmin.f32 %v592, %v593
        %v595 = vcvt.f32.s32.to.zero.pseudo %v581
        %v596 = vcvt.f32.s32.to.zero.pseudo %v594
        %v597 = vcombine.low %v595, %v596
        %v599 = vunpack.c.l.s4 1966171168
        %v600 = vunpack.c.0.s8 %v599
        %v601 = vlaneseq
        %v602 = vshrl.u32 %v601, 7
        %v603 = vsub.s32 %v600, %v602
        %v604 = vrot.slane %v597, %v603
        %v606 = vunpack.c.l.s4 1966171168
        %v607 = vunpack.c.0.s8 %v606
        %v608 = vlaneseq
        %v609 = vshrl.u32 %v608, 7
        %v610 = vsub.s32 %v607, %v609
        %v611 = vrot.slane %v604, %v610
        %v612 = vlaneseq
        %vm613 = vcmp.ge.s32.totalorder %v612, 0
        %vm614 = vcmp.lt.s32.totalorder %v612, 256
        %vm615 = vmand %vm613, %vm614
        %616 = vst.msk [vmem:[%s257] sm:$0x3] %vm615, %v611
        %vm617 = vcmp.eq.f32.partialorder %v529, %v581
        %vm618 = vcmp.eq.f32.partialorder %v529, %v594
        %vm619 = vcmp.eq.f32.partialorder %v530, %v581
        %vm620 = vcmp.eq.f32.partialorder %v530, %v594
        %vm621 = vcmp.eq.f32.partialorder %v531, %v581
        %vm622 = vcmp.eq.f32.partialorder %v531, %v594
        %vm623 = vcmp.eq.f32.partialorder %v532, %v581
        %vm624 = vcmp.eq.f32.partialorder %v532, %v594
        %vm625 = vcmp.eq.f32.partialorder %v533, %v581
        %vm626 = vcmp.eq.f32.partialorder %v533, %v594
        %vm627 = vcmp.eq.f32.partialorder %v534, %v581
        %vm628 = vcmp.eq.f32.partialorder %v534, %v594
        %vm629 = vcmp.eq.f32.partialorder %v535, %v581
        %vm630 = vcmp.eq.f32.partialorder %v535, %v594
        %vm631 = vcmp.eq.f32.partialorder %v536, %v581
        %vm632 = vcmp.eq.f32.partialorder %v536, %v594
        %v633 = vsel %vm617, 1, 0
        %v634 = vsel %vm618, 1, 0
        %v635 = vsel %vm619, 1, 0
        %v636 = vsel %vm620, 1, 0
        %v637 = vsel %vm621, 1, 0
        %v638 = vsel %vm622, 1, 0
        %v639 = vsel %vm623, 1, 0
        %v640 = vsel %vm624, 1, 0
        %v641 = vsel %vm625, 1, 0
        %v642 = vsel %vm626, 1, 0
        %v643 = vsel %vm627, 1, 0
        %v644 = vsel %vm628, 1, 0
        %v645 = vsel %vm629, 1, 0
        %v646 = vsel %vm630, 1, 0
        %v647 = vsel %vm631, 1, 0
        %v648 = vsel %vm632, 1, 0
        %v649 = vcvt.s32.f32 %v633
        %v650 = vcvt.s32.f32 %v634
        %v651 = vcvt.s32.f32 %v635
        %v652 = vcvt.s32.f32 %v636
        %v653 = vcvt.s32.f32 %v637
        %v654 = vcvt.s32.f32 %v638
        %v655 = vcvt.s32.f32 %v639
        %v656 = vcvt.s32.f32 %v640
        %v657 = vcvt.s32.f32 %v641
        %v658 = vcvt.s32.f32 %v642
        %v659 = vcvt.s32.f32 %v643
        %v660 = vcvt.s32.f32 %v644
        %v661 = vcvt.s32.f32 %v645
        %v662 = vcvt.s32.f32 %v646
        %v663 = vcvt.s32.f32 %v647
        %v664 = vcvt.s32.f32 %v648
        %665 = vxpose.xlu0.b32.start [1/16] %v284, 128
        %666 = vxpose.xlu0.b32.cont [2/16] %v285, 128
        %667 = vxpose.xlu0.b32.cont [3/16] %v286, 128
        %668 = vxpose.xlu0.b32.cont [4/16] %v287, 128
        %669 = vxpose.xlu0.b32.cont [5/16] %v288, 128
        %670 = vxpose.xlu0.b32.cont [6/16] %v289, 128
        %671 = vxpose.xlu0.b32.cont [7/16] %v290, 128
        %672 = vxpose.xlu0.b32.cont [8/16] %v291, 128
        %673 = vxpose.xlu0.b32.cont [9/16] 0.0, 128
        %674 = vxpose.xlu0.b32.cont [10/16] 0.0, 128
        %675 = vxpose.xlu0.b32.cont [11/16] 0.0, 128
        %676 = vxpose.xlu0.b32.cont [12/16] 0.0, 128
        %677 = vxpose.xlu0.b32.cont [13/16] 0.0, 128
        %678 = vxpose.xlu0.b32.cont [14/16] 0.0, 128
        %679 = vxpose.xlu0.b32.cont [15/16] 0.0, 128
        %680 = vxpose.xlu0.b32.end [16/16] 0.0, 128
        %v681 = vpop.trf.xlu0
        %v682 = vpop.trf.xlu0
        %v683 = vpop.trf.xlu0
        %v684 = vpop.trf.xlu0
        %v685 = vpop.trf.xlu0
        %v686 = vpop.trf.xlu0
        %v687 = vpop.trf.xlu0
        %v688 = vpop.trf.xlu0
        %v689 = vpop.trf.xlu0
        %v690 = vpop.trf.xlu0
        %v691 = vpop.trf.xlu0
        %v692 = vpop.trf.xlu0
        %v693 = vpop.trf.xlu0
        %v694 = vpop.trf.xlu0
        %v695 = vpop.trf.xlu0
        %v696 = vpop.trf.xlu0
        %vm697 = vcmask 523264
        %v699 = vsel %vm697, %v681, 0
        %v702 = vsel %vm697, %v682, 0
        %v705 = vsel %vm697, %v683, 0
        %v708 = vsel %vm697, %v684, 0
        %710 = vmatprep.subr.mxu0 %v650
        %711 = vmatpush1.msra.mxu0 %v649
        %712 = vmatprep.subr.mxu0 %v652
        %713 = vmatpush1.msra.mxu0 %v651
        %714 = vmatprep.subr.mxu0 %v654
        %715 = vmatpush1.msra.mxu0 %v653
        %716 = vmatprep.subr.mxu0 %v656
        %717 = vmatpush1.msra.mxu0 %v655
        %718 = vmatprep.subr.mxu0 %v658
        %719 = vmatpush1.msra.mxu0 %v657
        %720 = vmatprep.subr.mxu0 %v660
        %721 = vmatpush1.msra.mxu0 %v659
        %722 = vmatprep.subr.mxu0 %v662
        %723 = vmatpush1.msra.mxu0 %v661
        %724 = vmatprep.subr.mxu0 %v664
        %725 = vmatpush1.msra.mxu0 %v663
        %726 = vmatprep.subr.mxu0 0.0
        %727 = vmatpush1.msra.mxu0 0.0
        %728 = vmatprep.subr.mxu0 0.0
        %729 = vmatpush1.msra.mxu0 0.0
        %730 = vmatprep.subr.mxu0 0.0
        %731 = vmatpush1.msra.mxu0 0.0
        %732 = vmatprep.subr.mxu0 0.0
        %733 = vmatpush1.msra.mxu0 0.0
        %734 = vmatprep.subr.mxu0 0.0
        %735 = vmatpush1.msra.mxu0 0.0
        %736 = vmatprep.subr.mxu0 0.0
        %737 = vmatpush1.msra.mxu0 0.0
        %738 = vmatprep.subr.mxu0 0.0
        %739 = vmatpush1.msra.mxu0 0.0
        %740 = vmatprep.subr.mxu0 0.0
        %741 = vmatpush1.msra.mxu0 0.0
        %742 = vmatprep.subr.mxu0 0.0
        %743 = vmatpush1.msra.mxu0 0.0
        %744 = vmatprep.subr.mxu0 0.0
        %745 = vmatpush1.msra.mxu0 0.0
        %746 = vmatprep.subr.mxu0 0.0
        %747 = vmatpush1.msra.mxu0 0.0
        %748 = vmatprep.subr.mxu0 0.0
        %749 = vmatpush1.msra.mxu0 0.0
        %750 = vmatprep.subr.mxu0 0.0
        %751 = vmatpush1.msra.mxu0 0.0
        %752 = vmatprep.subr.mxu0 0.0
        %753 = vmatpush1.msra.mxu0 0.0
        %754 = vmatprep.subr.mxu0 0.0
        %755 = vmatpush1.msra.mxu0 0.0
        %756 = vmatprep.subr.mxu0 0.0
        %757 = vmatpush1.msra.mxu0 0.0
        %758 = vmatprep.subr.mxu0 0.0
        %759 = vmatpush1.msra.mxu0 0.0
        %760 = vmatprep.subr.mxu0 0.0
        %761 = vmatpush1.msra.mxu0 0.0
        %762 = vmatprep.subr.mxu0 0.0
        %763 = vmatpush1.msra.mxu0 0.0
        %764 = vmatprep.subr.mxu0 0.0
        %765 = vmatpush1.msra.mxu0 0.0
        %766 = vmatprep.subr.mxu0 0.0
        %767 = vmatpush1.msra.mxu0 0.0
        %768 = vmatprep.subr.mxu0 0.0
        %769 = vmatpush1.msra.mxu0 0.0
        %770 = vmatprep.subr.mxu0 0.0
        %771 = vmatpush1.msra.mxu0 0.0
        %772 = vmatprep.subr.mxu0 0.0
        %773 = vmatpush1.msra.mxu0 0.0
        %774 = vmatprep.mubr.f32.mxu0 0.0
        %775 = vmatmul.mubr.f32.gmra.mrb[0].mxu0 %v699
        %v776 = vpop.f32.mrb[0].mxu0
        %v777 = vadd.f32 0.0, %v776
        %v778 = vpop.f32.mrb[0].mxu0
        %v779 = vadd.f32 0.0, %v778
        %780 = vmatprep.mubr.f32.mxu0 0.0
        %781 = vmatmul.mubr.f32.gmra.mrb[0].mxu0 %v702
        %v782 = vpop.f32.mrb[0].mxu0
        %v783 = vadd.f32 0.0, %v782
        %v784 = vpop.f32.mrb[0].mxu0
        %v785 = vadd.f32 0.0, %v784
        %786 = vmatprep.mubr.f32.mxu0 0.0
        %787 = vmatmul.mubr.f32.gmra.mrb[0].mxu0 %v705
        %v788 = vpop.f32.mrb[0].mxu0
        %v789 = vadd.f32 0.0, %v788
        %v790 = vpop.f32.mrb[0].mxu0
        %v791 = vadd.f32 0.0, %v790
        %792 = vmatprep.mubr.f32.mxu0 0.0
        %793 = vmatmul.mubr.f32.gmra.mrb[0].mxu0 %v708
        %v794 = vpop.f32.mrb[0].mxu0
        %v795 = vadd.f32 0.0, %v794
        %v796 = vpop.f32.mrb[0].mxu0
        %v797 = vadd.f32 0.0, %v796
        %798 = vdwg.mxu0
        %799 = vst [vmem:[%s250] sm:$0xff] %v777
        %800 = vst [vmem:[%s250 + $0x8] sm:$0xff] %v779
        %801 = vst [vmem:[%s250 + $0x10] sm:$0xff] %v783
        %802 = vst [vmem:[%s250 + $0x18] sm:$0xff] %v785
        %803 = vst [vmem:[%s250 + $0x20] sm:$0xff] %v789
        %804 = vst [vmem:[%s250 + $0x28] sm:$0xff] %v791
        %805 = vst [vmem:[%s250 + $0x30] sm:$0xff] %v795
        %806 = vst [vmem:[%s250 + $0x38] sm:$0xff] %v797
        %v807 = vmul.f32 %v276, %v276
        %v808 = vmul.f32 %v277, %v277
        %v809 = vmul.f32 %v278, %v278
        %v810 = vmul.f32 %v279, %v279
        %v811 = vmul.f32 %v280, %v280
        %v812 = vmul.f32 %v281, %v281
        %v813 = vmul.f32 %v282, %v282
        %v814 = vmul.f32 %v283, %v283
        %v815 = vadd.f32 %v807, %v809
        %v816 = vadd.f32 %v815, %v811
        %v817 = vadd.f32 %v816, %v813
        %v818 = vrot.slane %v817, 4
        %v819 = vadd.f32 %v817, %v818
        %v820 = vrot.slane %v819, 2
        %v821 = vadd.f32 %v819, %v820
        %v822 = vrot.slane %v821, 1
        %v823 = vadd.f32 %v821, %v822
        %v824 = vadd.f32 %v808, %v810
        %v825 = vadd.f32 %v824, %v812
        %v826 = vadd.f32 %v825, %v814
        %v827 = vrot.slane %v826, 4
        %v828 = vadd.f32 %v826, %v827
        %v829 = vrot.slane %v828, 2
        %v830 = vadd.f32 %v828, %v829
        %v831 = vrot.slane %v830, 1
        %v832 = vadd.f32 %v830, %v831
        %v833 = vmul.f32 %v506, 2.0
        %v834 = vmul.f32 %v519, 2.0
        %v835 = vadd.f32 %v823, %v833
        %v836 = vadd.f32 %v832, %v834
        %v839 = vcombine.low %v835, %v836
        %v841 = vunpack.c.l.s4 1966171168
        %v842 = vunpack.c.0.s8 %v841
        %v843 = vlaneseq
        %v844 = vshrl.u32 %v843, 7
        %v845 = vsub.s32 %v842, %v844
        %v846 = vrot.slane %v839, %v845
        %v848 = vunpack.c.l.s4 1966171168
        %v849 = vunpack.c.0.s8 %v848
        %v850 = vlaneseq
        %v851 = vshrl.u32 %v850, 7
        %v852 = vsub.s32 %v849, %v851
        %v853 = vrot.slane %v846, %v852
        %855 = vst.msk [vmem:[%s264] sm:$0x3] %vm615, %v853
        %s856 = sand.u32 %s115, 1
        %s857 = scalar_lea.sflag [#allocation3], %s856
        %s858 = sand.u32 %s115, 1
        %s859 = smul.addr %s858, 64
        %s860 = scalar_lea.vmem [#allocation2], %s859
        %s861 = sand.u32 %s23, 1
        %s862 = scalar_lea.sflag [#allocation5], %s861
        %s863 = sand.u32 %s143, 1
        %s864 = smul.addr %s863, 2
        %s865 = scalar_lea.vmem [#allocation4], %s864
        %s866 = sand.u32 %s23, 1
        %s867 = scalar_lea.sflag [#allocation5], %s866
        %s868 = sand.u32 %s171, 1
        %s869 = smul.addr %s868, 2
        %s870 = scalar_lea.vmem [#allocation6], %s869
        // Predicated region
        $region33: #{tpu_custom_call.1} parent=31 // pred_check
          %p871 = pneg %p125
        $region34: #{tpu_custom_call.1} parent=31 // pred_check_branch
          %873 = sbr.rel (%p871) target = $region36
        $region35: #{tpu_custom_call.1} parent=31 // pred_region
          %s874 = smul.u32 2, %s28
          %s876 = ssub.s32 1024, 1024
          %877 = vsyncadd %s857, %s876
          %s878 = smul.addr %s27, 8
          %s879 = sadd.s32 %s874, %s878
          %s880 = smul.addr %s879, 128
          %s881 = scalar_lea.hbm %s3, %s880
          %s882 = sshll.u32 %s860, 4
          %s883 = int_to_ptr.vmem [resolvable:$true] %s882
          %888 = dma.vmem_to_hbm [thread:$0]  %s883, 1024, %s881, %s857, 256, 256, 16
        $region36: #{tpu_custom_call.1} parent=31 // pred_fallthru
          _
        // Predicated region
        $region37: #{tpu_custom_call.1} parent=31 // pred_check
          %p889 = pneg %p153
        $region38: #{tpu_custom_call.1} parent=31 // pred_check_branch
          %891 = sbr.rel (%p889) target = $region40
        $region39: #{tpu_custom_call.1} parent=31 // pred_region
          %s893 = ssub.s32 32, 32
          %894 = vsyncadd %s862, %s893
          %s895 = smul.addr %s28, 2
          %s896 = smul.addr %s27, 2
          %s897 = sadd.s32 %s895, %s896
          %s898 = smul.addr %s897, 16
          %s899 = scalar_lea.hbm %s4, %s898
          %s901 = sshll.u32 %s865, 4
          %s902 = int_to_ptr.vmem [resolvable:$true] %s901
          %904 = dma.vmem_to_hbm [thread:$0]  %s902, 32, %s899, %s862
        $region40: #{tpu_custom_call.1} parent=31 // pred_fallthru
          _
        // Predicated region
        $region41: #{tpu_custom_call.1} parent=31 // pred_check
          %p905 = pneg %p181
        $region42: #{tpu_custom_call.1} parent=31 // pred_check_branch
          %907 = sbr.rel (%p905) target = $region44
        $region43: #{tpu_custom_call.1} parent=31 // pred_region
          %s909 = ssub.s32 32, 32
          %910 = vsyncadd %s867, %s909
          %s911 = smul.addr %s28, 2
          %s912 = smul.addr %s27, 2
          %s913 = sadd.s32 %s911, %s912
          %s914 = smul.addr %s913, 16
          %s915 = scalar_lea.hbm %s5, %s914
          %s917 = sshll.u32 %s870, 4
          %s918 = int_to_ptr.vmem [resolvable:$true] %s917
          %920 = dma.vmem_to_hbm [thread:$0]  %s918, 32, %s915, %s867
        $region44: #{tpu_custom_call.1} parent=31 // pred_fallthru
          _
      $region32: #{tpu_custom_call.1} parent=5 // pred_fallthru
        _
      %p921 = scmp.le.s32.totalorder 2, %s18
      // Predicated region
      $region45: #{tpu_custom_call.1} parent=5 // pred_check
        %p922 = pneg %p921
      $region46: #{tpu_custom_call.1} parent=5 // pred_check_branch
        %924 = sbr.rel (%p922) target = $region48
      $region47: #{tpu_custom_call.1} parent=5 // pred_region
        %s925 = ssub.s32 %s18, 2
        // Predicated region
        $region49: #{tpu_custom_call.1} parent=47 // pred_check
          %p926 = pneg %p131
        $region50: #{tpu_custom_call.1} parent=47 // pred_check_branch
          %928 = sbr.rel (%p926) target = $region52
        $region51: #{tpu_custom_call.1} parent=47 // pred_region
          %s929 = sand.u32 %s116, 1
          %s930 = scalar_lea.sflag [#allocation3], %s929
          %s931 = sand.u32 %s116, 1
          %s932 = smul.addr %s931, 64
          %s933 = scalar_lea.vmem [#allocation2], %s932
          %934 = dma.done %s930, 1024
        $region52: #{tpu_custom_call.1} parent=47 // pred_fallthru
          _
        // Predicated region
        $region53: #{tpu_custom_call.1} parent=47 // pred_check
          %p935 = pneg %p159
        $region54: #{tpu_custom_call.1} parent=47 // pred_check_branch
          %937 = sbr.rel (%p935) target = $region56
        $region55: #{tpu_custom_call.1} parent=47 // pred_region
          %s938 = sand.u32 %s24, 1
          %s939 = scalar_lea.sflag [#allocation5], %s938
          %s940 = sand.u32 %s144, 1
          %s941 = smul.addr %s940, 2
          %s942 = scalar_lea.vmem [#allocation4], %s941
          %943 = dma.done %s939, 32
        $region56: #{tpu_custom_call.1} parent=47 // pred_fallthru
          _
        // Predicated region
        $region57: #{tpu_custom_call.1} parent=47 // pred_check
          %p944 = pneg %p187
        $region58: #{tpu_custom_call.1} parent=47 // pred_check_branch
          %946 = sbr.rel (%p944) target = $region60
        $region59: #{tpu_custom_call.1} parent=47 // pred_region
          %s947 = sand.u32 %s24, 1
          %s948 = scalar_lea.sflag [#allocation5], %s947
          %s949 = sand.u32 %s172, 1
          %s950 = smul.addr %s949, 2
          %s951 = scalar_lea.vmem [#allocation6], %s950
          %952 = dma.done %s948, 32
        $region60: #{tpu_custom_call.1} parent=47 // pred_fallthru
          _
      $region48: #{tpu_custom_call.1} parent=5 // pred_fallthru
        _
    $region6: #{tpu_custom_call.1} parent=1 // loop_footer
      %s22 = sadd.s32 1, %s18
    $region7: #{tpu_custom_call.1} parent=1 // loop_footer_branch
      %17 = sbr.rel target = $region3
    $region8: #{tpu_custom_call.1} parent=1 // loop_exit
      _
    %953 = vsyncpa [#allocation3], 1
    %s954 = scalar_lea.sflag [#allocation3], 1
    %955 = vsyncpa %s954, 1
    %956 = vsyncpa [#allocation5], 1
    %s957 = scalar_lea.sflag [#allocation5], 1
    %958 = vsyncpa %s957, 1

</llo_original>
